<compile_context>
chip_gen: v5e
topology: v5e:2x2
jax: 0.10.0
libtpu: 0.0.40
codegen_flags: <defaults>
</compile_context>

<pallas_src>
import functools

import jax
import jax.numpy as jnp
from jax.experimental import pallas as pl
from jax.experimental.pallas import tpu as pltpu


def _constrained_loss_kernel(vp_ref, vr_ref, sse_out_ref, nd_out_ref,
                             sse_acc, nd_acc):
    """Per-tile body.

    vp_ref / vr_ref : (bn, C, tile_s) input tiles (VMEM)
    sse_out_ref     : (1, 1) SMEM  -- sum of squared differences for this batch block
    nd_out_ref      : (1, 1) SMEM  -- sum of (|vp| - |vr|) for this batch block
    sse_acc         : (C, tile_s)  f32 VMEM scratch (lane-local partial sums)
    nd_acc          : (bn, tile_s) f32 VMEM scratch (lane-local partial sums)
    """
    si = pl.program_id(1)

    @pl.when(si == 0)
    def _init():
        sse_acc[...] = jnp.zeros_like(sse_acc)
        nd_acc[...] = jnp.zeros_like(nd_acc)

    vp = vp_ref[...].astype(jnp.float32)  # (bn, C, tile_s)
    vr = vr_ref[...].astype(jnp.float32)

    # MSE partial: reduce only over the leading batch axis (cheap cross-vreg
    # VPU adds); lanes/sublanes stay local until the epilogue.
    diff = vp - vr
    sse_acc[...] += jnp.sum(diff * diff, axis=0)  # (C, tile_s)

    # Velocity-magnitude difference from channels 0 / 1 (static slices).
    vp_norm = jnp.sqrt(vp[:, 0, :] ** 2 + vp[:, 1, :] ** 2)  # (bn, tile_s)
    vr_norm = jnp.sqrt(vr[:, 0, :] ** 2 + vr[:, 1, :] ** 2)
    nd_acc[...] += vp_norm - vr_norm  # (bn, tile_s), pure VPU adds

    # Single cross-lane reduction per batch block, paid once in the epilogue.
    @pl.when(si == pl.num_programs(1) - 1)
    def _finalize():
        sse_out_ref[0, 0] = jnp.sum(sse_acc[...])
        nd_out_ref[0, 0] = jnp.sum(nd_acc[...])


def _choose_tiling(n, c, s, itemsize, block_bytes):
    """Pick (bn, tile_s, n_pad, s_pad) so each input block is <= block_bytes."""
    lane = 128
    s_128 = -(-s // lane) * lane
    max_cols = max(lane, (block_bytes // (c * itemsize)) // lane * lane)
    tile_s = int(min(s_128, max_cols))
    s_pad = -(-s // tile_s) * tile_s
    bn = int(max(1, min(n, block_bytes // (c * tile_s * itemsize))))
    n_pad = -(-n // bn) * bn
    return bn, tile_s, n_pad, s_pad


def constrained_loss(v_pred, v_real, alpha=10.0, *,
                     block_bytes=2 * 1024 * 1024, use_pallas=True):
    assert v_pred.shape == v_real.shape
    n, c, h, w = v_pred.shape
    assert c >= 2, "need at least 2 channels for the norm term"

    s = h * w
    n_total = n * c * s
    n_spatial = n * s

    if not use_pallas:
        # Short-circuit for KB-scale inputs where pallas_call dispatch overhead
        # dominates; XLA's fused reduction wins there.
        return _reference(v_pred, v_real, alpha)

    itemsize = v_pred.dtype.itemsize

    # Lane-dense flatten (contiguous dims -> free reshape). Keep input dtype
    # (e.g. bf16) to halve HBM traffic; upcast happens per tile in the kernel.
    vp = v_pred.reshape(n, c, s)
    vr = v_real.reshape(n, c, s)

    bn, tile_s, n_pad, s_pad = _choose_tiling(n, c, s, itemsize, block_bytes)

    if (n_pad != n) or (s_pad != s):
        pad = ((0, n_pad - n), (0, 0), (0, s_pad - s))
        vp = jnp.pad(vp, pad)  # zero padding contributes 0 to both sums
        vr = jnp.pad(vr, pad)

    n_blocks = n_pad // bn
    s_blocks = s_pad // tile_s

    grid_spec = pltpu.PrefetchScalarGridSpec(
        num_scalar_prefetch=0,
        grid=(n_blocks, s_blocks),
        in_specs=[
            pl.BlockSpec((bn, c, tile_s), lambda ni, si: (ni, 0, si)),
            pl.BlockSpec((bn, c, tile_s), lambda ni, si: (ni, 0, si)),
        ],
        out_specs=[
            pl.BlockSpec((1, 1), lambda ni, si: (ni, 0), memory_space=pltpu.SMEM),
            pl.BlockSpec((1, 1), lambda ni, si: (ni, 0), memory_space=pltpu.SMEM),
        ],
        scratch_shapes=[
            pltpu.VMEM((c, tile_s), jnp.float32),
            pltpu.VMEM((bn, tile_s), jnp.float32),
        ],
    )

    cost = pl.CostEstimate(
        flops=5 * n_total + 10 * n_spatial,
        transcendentals=2 * n_spatial,
        bytes_accessed=2 * n_total * itemsize + 8 * n_blocks,
    )

    sse_parts, nd_parts = pl.pallas_call(
        _constrained_loss_kernel,
        grid_spec=grid_spec,
        out_shape=(
            jax.ShapeDtypeStruct((n_blocks, 1), jnp.float32),
            jax.ShapeDtypeStruct((n_blocks, 1), jnp.float32),
        ),
        compiler_params=pltpu.CompilerParams(
            dimension_semantics=("parallel", "arbitrary"),
        ),
        cost_estimate=cost,
    )(vp, vr)

    # Tiny wrapper-side combine (runtime-dynamic alpha, no recompile per alpha;
    # precomputed reciprocals instead of in-kernel divides).
    inv_total = 1.0 / float(n_total)
    inv_spatial = 1.0 / float(n_spatial)
    local_loss = jnp.sum(sse_parts) * jnp.float32(inv_total)
    global_loss = (jnp.sum(nd_parts) * jnp.float32(inv_spatial)) ** 2
    return local_loss + jnp.float32(alpha) * global_loss


def _reference(v_pred, v_real, alpha=10.0):
    local = jnp.mean((v_pred.astype(jnp.float32) - v_real.astype(jnp.float32)) ** 2)
    pn = jnp.sqrt(v_pred[:, 0].astype(jnp.float32) ** 2
                  + v_pred[:, 1].astype(jnp.float32) ** 2)
    rn = jnp.sqrt(v_real[:, 0].astype(jnp.float32) ** 2
                  + v_real[:, 1].astype(jnp.float32) ** 2)
    glob = jnp.mean(pn - rn) ** 2
    return local + alpha * glob


if __name__ == "__main__":
    key = jax.random.PRNGKey(0)

    # Test 1: module-sized input (batch=2, 2 velocity channels, 16x16 grid),
    # single grid step.
    k1, k2 = jax.random.split(key)
    v_pred = jax.random.normal(k1, (2, 2, 16, 16), dtype=jnp.float32)
    v_real = jax.random.normal(k2, (2, 2, 16, 16), dtype=jnp.float32)

    out = constrained_loss(v_pred, v_real, alpha=10.0)
    out = jax.block_until_ready(out)
    ref = _reference(v_pred, v_real, alpha=10.0)
    assert jnp.allclose(out, ref, rtol=1e-5, atol=1e-5), (out, ref)

    # Test 2: non-aligned shape with a tiny block budget to exercise the tiled
    # grid, batch/spatial zero-padding and the accumulator init/finalize path.
    k3, k4 = jax.random.split(k2)
    vp2 = jax.random.normal(k3, (3, 4, 33, 40), dtype=jnp.float32)
    vr2 = jax.random.normal(k4, (3, 4, 33, 40), dtype=jnp.float32)

    out2 = constrained_loss(vp2, vr2, alpha=3.5, block_bytes=8 * 1024)
    out2 = jax.block_until_ready(out2)
    ref2 = _reference(vp2, vr2, alpha=3.5)
    assert jnp.allclose(out2, ref2, rtol=1e-4, atol=1e-5), (out2, ref2)

    print("KERNEL_OK")
</pallas_src>

<mosaic_0001>
module attributes {stable_mosaic.version = 11 : i64} {
  func.func @_constrained_loss_kernel(%arg0: i32, %arg1: i32, %arg2: memref<2x2x256xf32, #tpu.memory_space<vmem>>, %arg3: memref<2x2x256xf32, #tpu.memory_space<vmem>>, %arg4: memref<1x1xf32, #tpu.memory_space<smem>>, %arg5: memref<1x1xf32, #tpu.memory_space<smem>>, %arg6: memref<2x256xf32, #tpu.memory_space<vmem>>, %arg7: memref<2x256xf32, #tpu.memory_space<vmem>>) attributes {dimension_semantics = [#tpu.dimension_semantics<parallel>, #tpu.dimension_semantics<arbitrary>], iteration_bounds = array<i64: 1, 1>, scalar_prefetch = 0 : i64, scratch_operands = 2 : i64, tpu.core_type = #tpu.core_type<tc>, window_params = [{transform_indices = @transform_0, window_bounds = array<i64: 2, 2, 256>}, {transform_indices = @transform_1, window_bounds = array<i64: 2, 2, 256>}, {transform_indices = @transform_2, window_bounds = array<i64: 1, 1>}, {transform_indices = @transform_3, window_bounds = array<i64: 1, 1>}]} {
    %c0_i32 = arith.constant 0 : i32
    %0 = arith.cmpi eq, %arg1, %c0_i32 : i32
    %1 = arith.extui %0 : i1 to i32
    %c0_i32_0 = arith.constant 0 : i32
    %2 = arith.cmpi ne, %1, %c0_i32_0 : i32
    scf.if %2 {
      %cst_16 = arith.constant 0.000000e+00 : f32
      %34 = vector.broadcast %cst_16 : f32 to vector<2x256xf32>
      %c0_17 = arith.constant 0 : index
      %c0_18 = arith.constant 0 : index
      %35 = vector.load %arg6[%c0_17, %c0_18] : memref<2x256xf32, #tpu.memory_space<vmem>>, vector<2x256xf32>
      tpu.vector_store %arg6[%c0_17, %c0_18], %34 {strides = array<i32>} : memref<2x256xf32, #tpu.memory_space<vmem>>, vector<2x256xf32>,
      %cst_19 = arith.constant 0.000000e+00 : f32
      %36 = vector.broadcast %cst_19 : f32 to vector<2x256xf32>
      %c0_20 = arith.constant 0 : index
      %c0_21 = arith.constant 0 : index
      %37 = vector.load %arg7[%c0_20, %c0_21] : memref<2x256xf32, #tpu.memory_space<vmem>>, vector<2x256xf32>
      tpu.vector_store %arg7[%c0_20, %c0_21], %36 {strides = array<i32>} : memref<2x256xf32, #tpu.memory_space<vmem>>, vector<2x256xf32>,
    } else {
    }
    %c0 = arith.constant 0 : index
    %c0_1 = arith.constant 0 : index
    %c0_2 = arith.constant 0 : index
    %3 = vector.load %arg2[%c0, %c0_1, %c0_2] : memref<2x2x256xf32, #tpu.memory_space<vmem>>, vector<2x2x256xf32>
    %c0_3 = arith.constant 0 : index
    %c0_4 = arith.constant 0 : index
    %c0_5 = arith.constant 0 : index
    %4 = vector.load %arg3[%c0_3, %c0_4, %c0_5] : memref<2x2x256xf32, #tpu.memory_space<vmem>>, vector<2x2x256xf32>
    %5 = arith.subf %3, %4 : vector<2x2x256xf32>
    %c0_6 = arith.constant 0 : index
    %c0_7 = arith.constant 0 : index
    %6 = vector.load %arg6[%c0_6, %c0_7] : memref<2x256xf32, #tpu.memory_space<vmem>>, vector<2x256xf32>
    %7 = arith.mulf %5, %5 : vector<2x2x256xf32>
    %cst = arith.constant dense<0.000000e+00> : vector<2x256xf32>
    %8 = vector.multi_reduction <add>, %7, %cst [0] : vector<2x2x256xf32> to vector<2x256xf32>
    %9 = arith.addf %6, %8 : vector<2x256xf32>
    %c0_8 = arith.constant 0 : index
    %c0_9 = arith.constant 0 : index
    %10 = vector.load %arg6[%c0_8, %c0_9] : memref<2x256xf32, #tpu.memory_space<vmem>>, vector<2x256xf32>
    tpu.vector_store %arg6[%c0_8, %c0_9], %9 {strides = array<i32>} : memref<2x256xf32, #tpu.memory_space<vmem>>, vector<2x256xf32>,
    %11 = vector.extract_strided_slice %3 {offsets = [0, 0, 0], sizes = [2, 1, 256], strides = [1, 1, 1]} : vector<2x2x256xf32> to vector<2x1x256xf32>
    %12 = vector.shape_cast %11 : vector<2x1x256xf32> to vector<2x256xf32>
    %13 = arith.mulf %12, %12 : vector<2x256xf32>
    %14 = vector.extract_strided_slice %3 {offsets = [0, 1, 0], sizes = [2, 1, 256], strides = [1, 1, 1]} : vector<2x2x256xf32> to vector<2x1x256xf32>
    %15 = vector.shape_cast %14 : vector<2x1x256xf32> to vector<2x256xf32>
    %16 = arith.mulf %15, %15 : vector<2x256xf32>
    %17 = arith.addf %13, %16 : vector<2x256xf32>
    %18 = math.sqrt %17 : vector<2x256xf32>
    %19 = vector.extract_strided_slice %4 {offsets = [0, 0, 0], sizes = [2, 1, 256], strides = [1, 1, 1]} : vector<2x2x256xf32> to vector<2x1x256xf32>
    %20 = vector.shape_cast %19 : vector<2x1x256xf32> to vector<2x256xf32>
    %21 = arith.mulf %20, %20 : vector<2x256xf32>
    %22 = vector.extract_strided_slice %4 {offsets = [0, 1, 0], sizes = [2, 1, 256], strides = [1, 1, 1]} : vector<2x2x256xf32> to vector<2x1x256xf32>
    %23 = vector.shape_cast %22 : vector<2x1x256xf32> to vector<2x256xf32>
    %24 = arith.mulf %23, %23 : vector<2x256xf32>
    %25 = arith.addf %21, %24 : vector<2x256xf32>
    %26 = math.sqrt %25 : vector<2x256xf32>
    %c0_10 = arith.constant 0 : index
    %c0_11 = arith.constant 0 : index
    %27 = vector.load %arg7[%c0_10, %c0_11] : memref<2x256xf32, #tpu.memory_space<vmem>>, vector<2x256xf32>
    %28 = arith.subf %18, %26 : vector<2x256xf32>
    %29 = arith.addf %27, %28 : vector<2x256xf32>
    %c0_12 = arith.constant 0 : index
    %c0_13 = arith.constant 0 : index
    %30 = vector.load %arg7[%c0_12, %c0_13] : memref<2x256xf32, #tpu.memory_space<vmem>>, vector<2x256xf32>
    tpu.vector_store %arg7[%c0_12, %c0_13], %29 {strides = array<i32>} : memref<2x256xf32, #tpu.memory_space<vmem>>, vector<2x256xf32>,
    %c0_i32_14 = arith.constant 0 : i32
    %31 = arith.cmpi eq, %arg1, %c0_i32_14 : i32
    %32 = arith.extui %31 : i1 to i32
    %c0_i32_15 = arith.constant 0 : i32
    %33 = arith.cmpi ne, %32, %c0_i32_15 : i32
    scf.if %33 {
      %c0_16 = arith.constant 0 : index
      %c0_17 = arith.constant 0 : index
      %34 = vector.load %arg6[%c0_16, %c0_17] : memref<2x256xf32, #tpu.memory_space<vmem>>, vector<2x256xf32>
      %35 = vector.shape_cast %34 : vector<2x256xf32> to vector<1x2x256xf32>
      %cst_18 = arith.constant dense<0.000000e+00> : vector<1xf32>
      %36 = vector.multi_reduction <add>, %35, %cst_18 [1, 2] : vector<1x2x256xf32> to vector<1xf32>
      %37 = vector.shape_cast %36 : vector<1xf32> to vector<1x1x1xf32>
      %38 = vector.extract %37[0, 0, 0] : f32 from vector<1x1x1xf32>
      %c0_19 = arith.constant 0 : index
      %c0_20 = arith.constant 0 : index
      %39 = memref.load %arg4[%c0_19, %c0_20] : memref<1x1xf32, #tpu.memory_space<smem>>
      memref.store %38, %arg4[%c0_19, %c0_20] : memref<1x1xf32, #tpu.memory_space<smem>>
      %c0_21 = arith.constant 0 : index
      %c0_22 = arith.constant 0 : index
      %40 = vector.load %arg7[%c0_21, %c0_22] : memref<2x256xf32, #tpu.memory_space<vmem>>, vector<2x256xf32>
      %41 = vector.shape_cast %40 : vector<2x256xf32> to vector<1x2x256xf32>
      %cst_23 = arith.constant dense<0.000000e+00> : vector<1xf32>
      %42 = vector.multi_reduction <add>, %41, %cst_23 [1, 2] : vector<1x2x256xf32> to vector<1xf32>
      %43 = vector.shape_cast %42 : vector<1xf32> to vector<1x1x1xf32>
      %44 = vector.extract %43[0, 0, 0] : f32 from vector<1x1x1xf32>
      %c0_24 = arith.constant 0 : index
      %c0_25 = arith.constant 0 : index
      %45 = memref.load %arg5[%c0_24, %c0_25] : memref<1x1xf32, #tpu.memory_space<smem>>
      memref.store %44, %arg5[%c0_24, %c0_25] : memref<1x1xf32, #tpu.memory_space<smem>>
    } else {
    }
    return
  }
  func.func @transform_0(%arg0: i32, %arg1: i32) -> (i32, i32, i32) {
    %c0_i32 = arith.constant 0 : i32
    %c0_i32_0 = arith.constant 0 : i32
    return %arg0, %c0_i32, %arg1 : i32, i32, i32
  }
  func.func @transform_1(%arg0: i32, %arg1: i32) -> (i32, i32, i32) {
    %c0_i32 = arith.constant 0 : i32
    %c0_i32_0 = arith.constant 0 : i32
    return %arg0, %c0_i32, %arg1 : i32, i32, i32
  }
  func.func @transform_2(%arg0: i32, %arg1: i32) -> (i32, i32) {
    %c0_i32 = arith.constant 0 : i32
    %c0_i32_0 = arith.constant 0 : i32
    return %arg0, %c0_i32 : i32, i32
  }
  func.func @transform_3(%arg0: i32, %arg1: i32) -> (i32, i32) {
    %c0_i32 = arith.constant 0 : i32
    %c0_i32_0 = arith.constant 0 : i32
    return %arg0, %c0_i32 : i32, i32
  }
}

</mosaic_0001>

<llo_original>
// kernel: tpu_custom_call.1
$region0: #{tpu_custom_call.1}
  #allocation0 [shape = 'u32[]', space=smem, size = 0x4, offset = 0x4, fixed_abs, tag = 'smem constant byte address 0x4 - core index']
  #allocation1 [shape = 'u32[72,128]{1,0:T(1,128)}', space=vmem, size = 0x9000, scoped, tag = 'internal scratch']
  #allocation2 [shape = 'f32[2,256]{1,0:T(2,128)}', space=vmem, size = 0x800, scoped, tag = 'scratch operand']
  #allocation3 [shape = 'f32[2,256]{1,0:T(2,128)}', space=vmem, size = 0x800, scoped, tag = 'scratch operand']
  %s0 = inlined_call_operand.hbm [shape: f32[2,2,256], index: 0, kind: input, shape index: {}]
  %s1 = inlined_call_operand.hbm [shape: f32[2,2,256], index: 1, kind: input, shape index: {}]
  %s2 = inlined_call_operand.hbm [shape: f32[1,1], index: 2, kind: output, shape index: {0}]
  %s3 = inlined_call_operand.hbm [shape: f32[1,1], index: 3, kind: output, shape index: {1}]
  %4 = xla_tuple %s2, %s3
  %s5 = sld [smem:[#allocation0]]
  $region42: #{tpu_custom_call.1} parent=0
    _
  %s7 = ssub.s32 1, %s5
  %s8 = scalar_select 0, %s7, %s5
  $region1: #{tpu_custom_call.1} parent=0
    #allocation4 [shape = 'u8[4096]{0}', space=vmem, size = 0x1000, scoped, tag = 'input window, operand 0, single buffered']
    #allocation5 [shape = 's32[1]{0}', space=sflag, size = 0x4, scoped, tag = 'scoped memory for tpu_custom_call.1']
    #allocation6 [shape = 's32[1]{0}', space=sflag, size = 0x4, scoped, tag = 'scoped memory for tpu_custom_call.1']
    #allocation7 [shape = 'u8[4096]{0}', space=vmem, size = 0x1000, scoped, tag = 'input window, operand 1, single buffered']
    #allocation8 [shape = 's32[1]{0}', space=sflag, size = 0x4, scoped, tag = 'scoped memory for tpu_custom_call.1']
    #allocation9 [shape = 'u8[512]{0}', space=smem, size = 0x200, scoped, tag = 'output window, operand 0, single buffered']
    #allocation10 [shape = 'u8[512]{0}', space=smem, size = 0x200, scoped, tag = 'output window, operand 1, single buffered']
    #allocation11 [shape = 's32[1]{0}', space=sflag, size = 0x4, scoped, tag = 'scoped memory for tpu_custom_call.1']
    %9 = vsyncpa [#allocation5], 0
    %10 = vsyncpa [#allocation8], 0
    %11 = vsyncpa [#allocation6], 0
    %12 = vsyncpa [#allocation11], 0
    // Predicated region
    $region2: #{tpu_custom_call.1} parent=1 // pred_check
      _
    $region3: #{tpu_custom_call.1} parent=1 // pred_check_branch
      %14 = sbr.rel (0) target = $region5
    $region4: #{tpu_custom_call.1} parent=1 // pred_region
      %16 = vsyncadd [#allocation5], 0
      %s17 = sshll.u32 %s0, 4
      %s18 = int_to_ptr.hbm [resolvable:$true] %s17
      %s19 = sshll.u32 [#allocation4], 4
      %s20 = int_to_ptr.vmem [resolvable:$true] %s19
      %25 = dma.hbm_to_vmem [thread:$0]  %s18, 128, %s20, [#allocation5], 64, 64, 4
    $region5: #{tpu_custom_call.1} parent=1 // pred_fallthru
      _
    // Predicated region
    $region6: #{tpu_custom_call.1} parent=1 // pred_check
      _
    $region7: #{tpu_custom_call.1} parent=1 // pred_check_branch
      %27 = sbr.rel (0) target = $region9
    $region8: #{tpu_custom_call.1} parent=1 // pred_region
      %29 = vsyncadd [#allocation8], 0
      %s30 = sshll.u32 %s1, 4
      %s31 = int_to_ptr.hbm [resolvable:$true] %s30
      %s32 = sshll.u32 [#allocation7], 4
      %s33 = int_to_ptr.vmem [resolvable:$true] %s32
      %38 = dma.hbm_to_vmem [thread:$0]  %s31, 128, %s33, [#allocation8], 64, 64, 4
    $region9: #{tpu_custom_call.1} parent=1 // pred_fallthru
      _
    // Predicated region
    $region10: #{tpu_custom_call.1} parent=1 // pred_check
      _
    $region11: #{tpu_custom_call.1} parent=1 // pred_check_branch
      %40 = sbr.rel (0) target = $region13
    $region12: #{tpu_custom_call.1} parent=1 // pred_region
      %42 = dma.done [#allocation5], 128
    $region13: #{tpu_custom_call.1} parent=1 // pred_fallthru
      _
    // Predicated region
    $region14: #{tpu_custom_call.1} parent=1 // pred_check
      _
    $region15: #{tpu_custom_call.1} parent=1 // pred_check_branch
      %44 = sbr.rel (0) target = $region17
    $region16: #{tpu_custom_call.1} parent=1 // pred_region
      %46 = dma.done [#allocation8], 128
    $region17: #{tpu_custom_call.1} parent=1 // pred_fallthru
      _
    %p47 = scmp.eq.s32.totalorder 0, 0
    // Predicated region
    $region18: #{tpu_custom_call.1} parent=1 // pred_check
      %p48 = pneg %p47
    $region19: #{tpu_custom_call.1} parent=1 // pred_check_branch
      %50 = sbr.rel (%p48) target = $region21
    $region20: #{tpu_custom_call.1} parent=1 // pred_region
      %51 = vst [vmem:[#allocation2] sm:$0xf] 0.0
      %52 = vst [vmem:[#allocation3] sm:$0xf] 0.0
    $region21: #{tpu_custom_call.1} parent=1 // pred_fallthru
      _
    %v53 = vld [vmem:[#allocation4] sm:$0xf]
    %v54 = vld [vmem:[#allocation4 + $0x4] sm:$0xf]
    %v55 = vld [vmem:[#allocation7] sm:$0xf]
    %v56 = vld [vmem:[#allocation7 + $0x4] sm:$0xf]
    %v57 = vsub.f32 %v53, %v55
    %v58 = vsub.f32 %v54, %v56
    %v59 = vld [vmem:[#allocation2] sm:$0xf]
    %v60 = vmul.f32 %v57, %v57
    %v61 = vmul.f32 %v58, %v58
    %64 = vst [vmem:[#allocation1] ss:$4 sm:$0xff] %v60
    %v65 = vld.sshfl [vmem:[#allocation1] sm:$0xff pattern:$0x73625140]
    %v66 = vld.sshfl [vmem:[#allocation1 + $0x8] sm:$0xff pattern:$0x73625140]
    %s67 = scalar_lea.vmem [#allocation1], 32
    %68 = vst [vmem:[%s67] ss:$4 sm:$0xff] %v61
    %v69 = vld.sshfl [vmem:[#allocation1 + $0x20] sm:$0xff pattern:$0x73625140]
    %v70 = vld.sshfl [vmem:[#allocation1 + $0x28] sm:$0xff pattern:$0x73625140]
    %vm75 = vcmask 1041408
    %v76 = vsel %vm75, %v65, 0.0
    %v77 = vsel %vm75, %v69, 0.0
    %v78 = vadd.f32 %v76, %v77
    %v79 = vsel %vm75, %v66, 0.0
    %v80 = vsel %vm75, %v70, 0.0
    %v81 = vadd.f32 %v79, %v80
    %v84 = vrot.slane %v81, 6
    %v85 = vsel %vm75, %v78, %v84
    %v87 = vadd.f32 %v59, %v85
    %88 = vst [vmem:[#allocation2] sm:$0xf] %v87
    %v89 = vmul.f32 %v53, %v53
    %v90 = vmul.f32 %v54, %v54
    %v93 = vrot.slane %v89, 7
    %v94 = vrot.slane %v93, 2
    %v95 = vrot.slane %v90, 7
    %v96 = vrot.slane %v95, 2
    %v99 = vadd.f32 %v89, %v94
    %v100 = vadd.f32 %v90, %v96
    %v101 = vrsqrt.pop %v99
    %v102 = vmul.f32 %v101, %v99
    %v103 = vmul.f32 %v102, %v101
    %v104 = vmul.f32 0.5, %v103
    %v105 = vsub.f32 1.5, %v104
    %v106 = vmul.f32 %v101, %v105
    %v107 = vmul.f32 %v99, %v106
    %vm108 = vcmp.eq.f32.partialorder %v99, inf
    %v109 = vsel %vm108, %v99, %v107
    %vm110 = vcmp.eq.f32.partialorder %v99, 0.0
    %v111 = vand.u32 %v99, 2147483648
    %v112 = vsel %vm110, %v111, %v109
    %v113 = vrsqrt.pop %v100
    %v114 = vmul.f32 %v113, %v100
    %v115 = vmul.f32 %v114, %v113
    %v116 = vmul.f32 0.5, %v115
    %v117 = vsub.f32 1.5, %v116
    %v118 = vmul.f32 %v113, %v117
    %v119 = vmul.f32 %v100, %v118
    %vm120 = vcmp.eq.f32.partialorder %v100, inf
    %v121 = vsel %vm120, %v100, %v119
    %vm122 = vcmp.eq.f32.partialorder %v100, 0.0
    %v123 = vand.u32 %v100, 2147483648
    %v124 = vsel %vm122, %v123, %v121
    %v125 = vmul.f32 %v55, %v55
    %v126 = vmul.f32 %v56, %v56
    %v129 = vrot.slane %v125, 7
    %v130 = vrot.slane %v129, 2
    %v131 = vrot.slane %v126, 7
    %v132 = vrot.slane %v131, 2
    %v135 = vadd.f32 %v125, %v130
    %v136 = vadd.f32 %v126, %v132
    %v137 = vrsqrt.pop %v135
    %v138 = vmul.f32 %v137, %v135
    %v139 = vmul.f32 %v138, %v137
    %v140 = vmul.f32 0.5, %v139
    %v141 = vsub.f32 1.5, %v140
    %v142 = vmul.f32 %v137, %v141
    %v143 = vmul.f32 %v135, %v142
    %vm144 = vcmp.eq.f32.partialorder %v135, inf
    %v145 = vsel %vm144, %v135, %v143
    %vm146 = vcmp.eq.f32.partialorder %v135, 0.0
    %v147 = vand.u32 %v135, 2147483648
    %v148 = vsel %vm146, %v147, %v145
    %v149 = vrsqrt.pop %v136
    %v150 = vmul.f32 %v149, %v136
    %v151 = vmul.f32 %v150, %v149
    %v152 = vmul.f32 0.5, %v151
    %v153 = vsub.f32 1.5, %v152
    %v154 = vmul.f32 %v149, %v153
    %v155 = vmul.f32 %v136, %v154
    %vm156 = vcmp.eq.f32.partialorder %v136, inf
    %v157 = vsel %vm156, %v136, %v155
    %vm158 = vcmp.eq.f32.partialorder %v136, 0.0
    %v159 = vand.u32 %v136, 2147483648
    %v160 = vsel %vm158, %v159, %v157
    %v161 = vld [vmem:[#allocation3] sm:$0xf]
    %v162 = vsub.f32 %v112, %v148
    %v163 = vsub.f32 %v124, %v160
    %vm166 = vcmask 1044484
    %v167 = vsel %vm166, %v162, %v162
    %vm168 = vcmask 1046534
    %v169 = vsel %vm168, %v162, %v167
    %v170 = vrot.slane %v163, 7
    %vm171 = vcmask 1041409
    %v172 = vsel %vm171, %v170, %v169
    %vm173 = vcmask 1043459
    %v174 = vsel %vm173, %v170, %v172
    %vm175 = vcmask 1045509
    %v176 = vsel %vm175, %v170, %v174
    %vm177 = vcmask 1047559
    %v178 = vsel %vm177, %v170, %v176
    %v180 = vadd.f32 %v161, %v178
    %181 = vst [vmem:[#allocation3] sm:$0xf] %v180
    // Predicated region
    $region22: #{tpu_custom_call.1} parent=1 // pred_check
      %p182 = pneg %p47
    $region23: #{tpu_custom_call.1} parent=1 // pred_check_branch
      %184 = sbr.rel (%p182) target = $region25
    $region24: #{tpu_custom_call.1} parent=1 // pred_region
      %v185 = vld [vmem:[#allocation2] sm:$0xf]
      %187 = vst [vmem:[#allocation1] ss:$4 sm:$0xff] %v185
      %v188 = vld.sshfl [vmem:[#allocation1] sm:$0xff pattern:$0x73625140]
      %v189 = vld.sshfl [vmem:[#allocation1 + $0x8] sm:$0xff pattern:$0x73625140]
      %v192 = vsel %vm75, %v188, 0.0
      %v193 = vsel %vm75, %v189, 0.0
      %v194 = vadd.f32 %v192, %v193
      %195 = vadd.xlane.f32.xlu0 %v194
      %v196 = vpop.xlane.xlu0 %195
      %v197 = vrot.slane %v196, 4
      %v198 = vadd.f32 %v196, %v197
      %v199 = vrot.slane %v198, 2
      %v200 = vadd.f32 %v198, %v199
      %v201 = vrot.slane %v200, 1
      %v202 = vadd.f32 %v200, %v201
      %s203 = vtos %v202
      %s204 = scalar_lea.smem [#allocation9], 0
      %205 = sst [smem:[%s204]] %s203
      %v206 = vld [vmem:[#allocation3] sm:$0xf]
      %208 = vst [vmem:[#allocation1] ss:$4 sm:$0xff] %v206
      %v209 = vld.sshfl [vmem:[#allocation1] sm:$0xff pattern:$0x73625140]
      %v210 = vld.sshfl [vmem:[#allocation1 + $0x8] sm:$0xff pattern:$0x73625140]
      %v213 = vsel %vm75, %v209, 0.0
      %v214 = vsel %vm75, %v210, 0.0
      %v215 = vadd.f32 %v213, %v214
      %216 = vadd.xlane.f32.xlu0 %v215
      %v217 = vpop.xlane.xlu0 %216
      %v218 = vrot.slane %v217, 4
      %v219 = vadd.f32 %v217, %v218
      %v220 = vrot.slane %v219, 2
      %v221 = vadd.f32 %v219, %v220
      %v222 = vrot.slane %v221, 1
      %v223 = vadd.f32 %v221, %v222
      %s224 = vtos %v223
      %s225 = scalar_lea.smem [#allocation10], 0
      %226 = sst [smem:[%s225]] %s224
    $region25: #{tpu_custom_call.1} parent=1 // pred_fallthru
      _
    // Predicated region
    $region26: #{tpu_custom_call.1} parent=1 // pred_check
      _
    $region27: #{tpu_custom_call.1} parent=1 // pred_check_branch
      %228 = sbr.rel (0) target = $region29
    $region28: #{tpu_custom_call.1} parent=1 // pred_region
      %230 = vsyncadd [#allocation6], 0
      %s232 = sshll.u32 %s2, 4
      %s233 = int_to_ptr.hbm [resolvable:$true] %s232
      %235 = dma.smem_to_hbm [#allocation9], 16, %s233, [#allocation6]
    $region29: #{tpu_custom_call.1} parent=1 // pred_fallthru
      _
    // Predicated region
    $region30: #{tpu_custom_call.1} parent=1 // pred_check
      _
    $region31: #{tpu_custom_call.1} parent=1 // pred_check_branch
      %237 = sbr.rel (0) target = $region33
    $region32: #{tpu_custom_call.1} parent=1 // pred_region
      %239 = vsyncadd [#allocation11], 0
      %s241 = sshll.u32 %s3, 4
      %s242 = int_to_ptr.hbm [resolvable:$true] %s241
      %244 = dma.smem_to_hbm [#allocation10], 16, %s242, [#allocation11]
    $region33: #{tpu_custom_call.1} parent=1 // pred_fallthru
      _
    // Predicated region
    $region34: #{tpu_custom_call.1} parent=1 // pred_check
      _
    $region35: #{tpu_custom_call.1} parent=1 // pred_check_branch
      %246 = sbr.rel (0) target = $region37
    $region36: #{tpu_custom_call.1} parent=1 // pred_region
      %248 = dma.done [#allocation6], 16
    $region37: #{tpu_custom_call.1} parent=1 // pred_fallthru
      _
    // Predicated region
    $region38: #{tpu_custom_call.1} parent=1 // pred_check
      _
    $region39: #{tpu_custom_call.1} parent=1 // pred_check_branch
      %250 = sbr.rel (0) target = $region41
    $region40: #{tpu_custom_call.1} parent=1 // pred_region
      %252 = dma.done [#allocation11], 16
    $region41: #{tpu_custom_call.1} parent=1 // pred_fallthru
      _
    %253 = sfence
    %254 = vsyncpa [#allocation5], 1
    %255 = vsyncpa [#allocation8], 1
    %256 = vsyncpa [#allocation6], 1
    %257 = vsyncpa [#allocation11], 1

</llo_original>
